<compile_context>
chip_gen: v5e
topology: v5e:2x2
jax: 0.10.0
libtpu: 0.0.40
codegen_flags: <defaults>
</compile_context>

<pallas_src>
import functools

import jax
import jax.numpy as jnp
from jax.experimental import pallas as pl
from jax.experimental.pallas import tpu as pltpu


def _round_up(x, m):
    return (x + m - 1) // m * m


def _pad2d(a, row_mult, col_mult):
    r, c = a.shape
    rp = _round_up(r, row_mult) - r
    cp = _round_up(c, col_mult) - c
    if rp or cp:
        a = jnp.pad(a, ((0, rp), (0, cp)))
    return a


def _pick_tile(dim, preferred):
    for t in preferred:
        if dim % t == 0:
            return t
    return dim  # dim is always a multiple of 128 here, so we never get this far


# ----------------------------- kernels --------------------------------------


def _project_kernel(x_ref, w_ref, h_ref):
    # Fused root+neighbor projection: H = x @ [W_l | W_r]
    # (bf16 operands, f32 accumulation on the MXU, bf16 stored).
    h_ref[...] = jnp.dot(
        x_ref[...], w_ref[...], preferred_element_type=jnp.float32
    ).astype(h_ref.dtype)


def _aggregate_kernel(adj_ref, hl_ref, hr_ref, b_ref, out_ref, acc_ref, *, apply_relu):
    k = pl.program_id(2)

    @pl.when(k == 0)
    def _init():
        acc_ref[...] = jnp.zeros_like(acc_ref)

    # Mean-aggregation contraction over neighbors: (TM,TK) @ (TK,TN) on the MXU.
    acc_ref[...] += jnp.dot(
        adj_ref[...], hl_ref[...], preferred_element_type=jnp.float32
    )

    @pl.when(k == pl.num_programs(2) - 1)
    def _finalize():
        # Root term + bias (+ ReLU) only once, on the finished f32 accumulator.
        out = acc_ref[...] + hr_ref[...].astype(jnp.float32) + b_ref[...]
        if apply_relu:
            out = jnp.maximum(out, 0.0)
        out_ref[...] = out.astype(out_ref.dtype)


# ------------------------- one SAGEConv layer --------------------------------


def sage_conv(adj_bf, x_bf, w_cat_bf, b, *, apply_relu):
    """One SAGEConv layer: out = adj @ (x @ W_l) + x @ W_r + b (+ optional ReLU).

    adj_bf:   (N_pad, N_pad) bf16 row-normalized adjacency (mean aggregation)
    x_bf:     (N_pad, F_in_pad) bf16 node features
    w_cat_bf: (F_in_pad, 2*F_out_pad) bf16, columns = [W_l | W_r]
    b:        (1, F_out_pad) f32 bias
    """
    n_pad = adj_bf.shape[0]
    f_in_pad = x_bf.shape[1]
    f_out_pad = b.shape[1]

    tm = _pick_tile(n_pad, (256, 128))        # output row tile
    tk = _pick_tile(n_pad, (512, 256, 128))   # neighbor-contraction tile
    tn = _pick_tile(f_out_pad, (256, 128))    # output feature tile (lane-dense)

    # <= default scoped VMEM on v6e/v7x, explicit raise over v5e's 16 MiB default.
    vmem_limit = 32 * 1024 * 1024

    # --- fused projection: H = x @ [W_l | W_r] -> (N_pad, 2*F_out_pad) bf16 ---
    h = pl.pallas_call(
        _project_kernel,
        out_shape=jax.ShapeDtypeStruct((n_pad, 2 * f_out_pad), jnp.bfloat16),
        grid_spec=pltpu.PrefetchScalarGridSpec(
            num_scalar_prefetch=0,
            grid=(n_pad // tm, (2 * f_out_pad) // tn),
            in_specs=[
                pl.BlockSpec((tm, f_in_pad), lambda i, j: (i, 0)),   # x rows
                pl.BlockSpec((f_in_pad, tn), lambda i, j: (0, j)),   # [W_l|W_r]
            ],
            out_specs=pl.BlockSpec((tm, tn), lambda i, j: (i, j)),
        ),
        compiler_params=pltpu.CompilerParams(
            dimension_semantics=("parallel", "parallel"),
            vmem_limit_bytes=vmem_limit,
        ),
    )(x_bf, w_cat_bf)

    # --- tiled aggregation + root + bias (+ReLU) ------------------------------
    hr_off = f_out_pad // tn  # block-column offset of the H_r half inside H

    kernel = functools.partial(_aggregate_kernel, apply_relu=apply_relu)
    out = pl.pallas_call(
        kernel,
        out_shape=jax.ShapeDtypeStruct((n_pad, f_out_pad), jnp.float32),
        grid_spec=pltpu.PrefetchScalarGridSpec(
            num_scalar_prefetch=0,
            grid=(n_pad // tm, f_out_pad // tn, n_pad // tk),
            in_specs=[
                pl.BlockSpec((tm, tk), lambda i, j, k: (i, k)),           # adj
                pl.BlockSpec((tk, tn), lambda i, j, k: (k, j)),           # H_l
                pl.BlockSpec((tm, tn), lambda i, j, k: (i, j + hr_off)),  # H_r
                pl.BlockSpec((1, tn), lambda i, j, k: (0, j)),            # bias
            ],
            out_specs=pl.BlockSpec((tm, tn), lambda i, j, k: (i, j)),
            scratch_shapes=[pltpu.VMEM((tm, tn), jnp.float32)],           # f32 acc
        ),
        compiler_params=pltpu.CompilerParams(
            dimension_semantics=("parallel", "parallel", "arbitrary"),
            vmem_limit_bytes=vmem_limit,
        ),
    )(adj_bf, h, h, b)
    return out


# ------------------------------ full model -----------------------------------


def sage_forward(x, adj_norm, params, dropout=0.5, training=False):
    """SAGE.forward: convs[:-1] -> relu -> dropout ; convs[-1] plain (eval mode)."""
    n = x.shape[0]
    f_out_final = params[-1][0].shape[1]

    # Pad once, cast the dominant (HBM-bound) adjacency to bf16, reuse per layer.
    adj_bf = _pad2d(adj_norm, 128, 128).astype(jnp.bfloat16)
    x_p = _pad2d(x, 128, 128)

    num_layers = len(params)
    for i, (w_l, w_r, b) in enumerate(params):
        w_cat = jnp.concatenate(
            [_pad2d(w_l, 128, 128), _pad2d(w_r, 128, 128)], axis=1
        ).astype(jnp.bfloat16)                          # (F_in_pad, 2*F_out_pad)
        b_p = _pad2d(b, 1, 128).astype(jnp.float32)     # (1, F_out_pad)
        x_p = sage_conv(
            adj_bf,
            x_p.astype(jnp.bfloat16),
            w_cat,
            b_p,
            apply_relu=(i != num_layers - 1),
        )
        # F.dropout(x, p=dropout, training=training) is identity in eval mode.
        # TODO(synk): training-mode dropout (pltpu.prng_random_bits mask) not wired in.
    return x_p[:n, :f_out_final]


# ------------------------------ test harness ---------------------------------


def _init_params(key, in_channels, hidden_channels, out_channels, num_layers):
    """Deterministic glorot-ish init; weights stored as (F_in, F_out)."""
    dims = [in_channels] + [hidden_channels] * (num_layers - 1) + [out_channels]
    params = []
    for li in range(num_layers):
        f_in, f_out = dims[li], dims[li + 1]
        key, k1, k2, k3 = jax.random.split(key, 4)
        scale = (2.0 / (f_in + f_out)) ** 0.5
        w_l = scale * jax.random.normal(k1, (f_in, f_out), jnp.float32)
        w_r = scale * jax.random.normal(k2, (f_in, f_out), jnp.float32)
        b = 0.1 * jax.random.normal(k3, (1, f_out), jnp.float32)
        params.append((w_l, w_r, b))
    return params


def _reference_forward(x, adj_norm, params):
    """Pure-JAX reference mimicking the kernel numerics (bf16 operands, f32 accum)."""

    def bf(a):
        return a.astype(jnp.bfloat16).astype(jnp.float32)

    adj = bf(adj_norm)
    h = x
    num_layers = len(params)
    for i, (w_l, w_r, b) in enumerate(params):
        hb = bf(h)
        hl = bf(hb @ bf(w_l))   # projection output stored bf16 in the kernel
        hr = bf(hb @ bf(w_r))
        out = adj @ hl + hr + b
        if i != num_layers - 1:
            out = jnp.maximum(out, 0.0)
        h = out
    return h


if __name__ == "__main__":
    # Small-but-real shapes: N pads 1000 -> 1024 so the tiled grid actually has
    # multiple row / contraction steps (and exercises the padding path).
    N = 1000
    in_channels, hidden_channels, out_channels = 16, 32, 8
    num_layers = 3
    dropout = 0.5

    key = jax.random.PRNGKey(0)
    kx, kadj, kparams = jax.random.split(key, 3)

    x = jax.random.normal(kx, (N, in_channels), jnp.float32)

    # Dense random adjacency (adj_t analogue), row-normalized => mean aggregation.
    a = (jax.random.uniform(kadj, (N, N)) < 0.05).astype(jnp.float32)
    deg = jnp.maximum(a.sum(axis=1, keepdims=True), 1.0)
    adj_norm = a / deg

    params = _init_params(kparams, in_channels, hidden_channels, out_channels, num_layers)

    out = sage_forward(x, adj_norm, params, dropout=dropout, training=False)
    out = jax.block_until_ready(out)

    ref = _reference_forward(x, adj_norm, params)
    assert out.shape == (N, out_channels)
    max_err = float(jnp.max(jnp.abs(out - ref)))
    assert jnp.allclose(out, ref, atol=2e-2, rtol=2e-2), max_err

    print("KERNEL_OK")
</pallas_src>

<mosaic_0001>
module attributes {stable_mosaic.version = 11 : i64} {
  func.func @_project_kernel(%arg0: i32, %arg1: i32, %arg2: memref<256x128xbf16, #tpu.memory_space<vmem>>, %arg3: memref<128x128xbf16, #tpu.memory_space<vmem>>, %arg4: memref<256x128xbf16, #tpu.memory_space<vmem>>) attributes {dimension_semantics = [#tpu.dimension_semantics<parallel>, #tpu.dimension_semantics<parallel>], iteration_bounds = array<i64: 4, 2>, scalar_prefetch = 0 : i64, scratch_operands = 0 : i64, tpu.core_type = #tpu.core_type<tc>, window_params = [{transform_indices = @transform_0, window_bounds = array<i64: 256, 128>}, {transform_indices = @transform_1, window_bounds = array<i64: 128, 128>}, {transform_indices = @transform_2, window_bounds = array<i64: 256, 128>}]} {
    %c0 = arith.constant 0 : index
    %c0_0 = arith.constant 0 : index
    %0 = vector.load %arg2[%c0, %c0_0] : memref<256x128xbf16, #tpu.memory_space<vmem>>, vector<256x128xbf16>
    %c0_1 = arith.constant 0 : index
    %c0_2 = arith.constant 0 : index
    %1 = vector.load %arg3[%c0_1, %c0_2] : memref<128x128xbf16, #tpu.memory_space<vmem>>, vector<128x128xbf16>
    %cst = arith.constant dense<0.000000e+00> : vector<256x128xf32>
    %2 = tpu.matmul %0, %1, %cst {dimension_numbers = #tpu.dot_dimension_numbers<[1], [0], [0], [1], [0, 0, 1, 1], [], []>} : vector<256x128xbf16>, vector<128x128xbf16>, vector<256x128xf32> -> vector<256x128xf32>
    %3 = arith.truncf %2 : vector<256x128xf32> to vector<256x128xbf16>
    %c0_3 = arith.constant 0 : index
    %c0_4 = arith.constant 0 : index
    %4 = vector.load %arg4[%c0_3, %c0_4] : memref<256x128xbf16, #tpu.memory_space<vmem>>, vector<256x128xbf16>
    tpu.vector_store %arg4[%c0_3, %c0_4], %3 {strides = array<i32>} : memref<256x128xbf16, #tpu.memory_space<vmem>>, vector<256x128xbf16>,
    return
  }
  func.func @transform_0(%arg0: i32, %arg1: i32) -> (i32, i32) {
    %c0_i32 = arith.constant 0 : i32
    %c0_i32_0 = arith.constant 0 : i32
    return %arg0, %c0_i32 : i32, i32
  }
  func.func @transform_1(%arg0: i32, %arg1: i32) -> (i32, i32) {
    %c0_i32 = arith.constant 0 : i32
    %c0_i32_0 = arith.constant 0 : i32
    return %c0_i32, %arg1 : i32, i32
  }
  func.func @transform_2(%arg0: i32, %arg1: i32) -> (i32, i32) {
    %c0_i32 = arith.constant 0 : i32
    return %arg0, %arg1 : i32, i32
  }
}

</mosaic_0001>

<llo_original>
// kernel: tpu_custom_call.1
$region0: #{tpu_custom_call.1}
  #allocation0 [shape = 'u32[]', space=smem, size = 0x4, offset = 0x4, fixed_abs, tag = 'smem constant byte address 0x4 - core index']
  #allocation1 [shape = 'u32[72,128]{1,0:T(1,128)}', space=vmem, size = 0x9000, scoped, tag = 'internal scratch']
  %s0 = inlined_call_operand.hbm [shape: bf16[1024,128], index: 0, kind: input, shape index: {}]
  %s1 = inlined_call_operand.hbm [shape: bf16[128,256], index: 1, kind: input, shape index: {}]
  %s2 = inlined_call_operand.hbm [shape: bf16[1024,256], index: 2, kind: output, shape index: {}]
  %s3 = sld [smem:[#allocation0]]
  $region49: #{tpu_custom_call.1} parent=0
    _
  %s5 = ssub.s32 1, %s3
  %s6 = scalar_select 0, %s5, %s3
  $region1: #{tpu_custom_call.1} parent=0
    #allocation2 [shape = 'u8[131072]{0}', space=vmem, size = 0x20000, scoped, tag = 'input window, operand 0']
    #allocation3 [shape = 's32[2]{0}', space=sflag, size = 0x8, scoped, tag = 'scoped memory for tpu_custom_call.1']
    #allocation4 [shape = 's32[2]{0}', space=sflag, size = 0x8, scoped, tag = 'scoped memory for tpu_custom_call.1']
    #allocation5 [shape = 'u8[65536]{0}', space=vmem, size = 0x10000, scoped, tag = 'input window, operand 1']
    #allocation6 [shape = 's32[2]{0}', space=sflag, size = 0x8, scoped, tag = 'scoped memory for tpu_custom_call.1']
    #allocation7 [shape = 'u8[131072]{0}', space=vmem, size = 0x20000, scoped, tag = 'output window, operand 0']
    %7 = vsyncpa [#allocation3], 0
    %s8 = scalar_lea.sflag [#allocation3], 1
    %9 = vsyncpa %s8, 0
    %10 = vsyncpa [#allocation6], 0
    %s11 = scalar_lea.sflag [#allocation6], 1
    %12 = vsyncpa %s11, 0
    %13 = vsyncpa [#allocation4], 0
    %s14 = scalar_lea.sflag [#allocation4], 1
    %15 = vsyncpa %s14, 0
    loop: start=0, step=1, limit=10
    $region2: #{tpu_custom_call.1} parent=1 // loop_pre_header
      _
    $region3: #{tpu_custom_call.1} parent=1 // loop_header
      %s17 = sphi 0, %s21
      %p18 = scmp.ge.s32.totalorder %s17, 10
      %s24 = sphi 0, %s36
      %s25 = sphi 0, %s32
      %s26 = sphi 0, %s24
      %s27 = sphi 0, %s25
      %s28 = sphi 0, %s26
      %s29 = sphi 0, %s27
      %s39 = sphi 0, %s41
      %s42 = sphi 0, %s39
      %s43 = sphi 0, %s42
      %s59 = sphi 0, %s43
      %s65 = sphi 0, %s67
      %s68 = sphi 0, %s65
      %s69 = sphi 0, %s68
      %s85 = sphi 0, %s69
      %s93 = sphi 0, %s95
      %s96 = sphi 0, %s93
      %s97 = sphi 0, %s96
      %s113 = sphi 0, %s97
    $region4: #{tpu_custom_call.1} parent=1 // loop_header_branch
      %20 = sbr.rel (%p18) target = $region8
    $region5: #{tpu_custom_call.1} parent=1 // loop_body
      %s22 = ssub.s32 %s17, 1
      %s23 = ssub.s32 %s17, 2
      %s30 = sadd.s32 1, %s25
      %p31 = scmp.ge.s32.totalorder %s30, 2
      %s32 = scalar_select %p31, 0, %s30
      %s33 = sadd.s32 1, %s24
      %s34 = scalar_select %p31, %s33, %s24
      %p35 = scmp.ge.s32.totalorder %s34, 4
      %s36 = scalar_select %p35, 0, %s34
      %s37 = ssub.s32 %s24, %s36
      %p38 = scmp.eq.s32.totalorder %s37, 0
      %s40 = sadd.s32 %s39, 1
      %s41 = scalar_select %p38, %s39, %s40
      %p44 = pneg %p38
      %p45 = scmp.eq.s32.totalorder %s17, 7
      %p46 = por %p44, %p45
      %p47 = scmp.ne.s32.totalorder %s39, %s42
      %p48 = scmp.eq.s32.totalorder %s17, 0
      %p49 = por %p47, %p48
      %p50 = scmp.ne.s32.totalorder %s39, %s42
      %p51 = scmp.eq.s32.totalorder %s22, 7
      %p52 = por %p50, %p51
      %p53 = scmp.ne.s32.totalorder %s42, %s43
      %p54 = scmp.eq.s32.totalorder %s22, 0
      %p55 = por %p53, %p54
      %p56 = scmp.ne.s32.totalorder %s42, %s43
      %p57 = scmp.eq.s32.totalorder %s23, 7
      %p58 = por %p56, %p57
      %p60 = scmp.ne.s32.totalorder %s43, %s59
      %p61 = scmp.eq.s32.totalorder %s23, 0
      %p62 = por %p60, %p61
      %s63 = ssub.s32 %s25, %s32
      %p64 = scmp.eq.s32.totalorder %s63, 0
      %s66 = sadd.s32 %s65, 1
      %s67 = scalar_select %p64, %s65, %s66
      %p70 = pneg %p64
      %p71 = scmp.eq.s32.totalorder %s17, 7
      %p72 = por %p70, %p71
      %p73 = scmp.ne.s32.totalorder %s65, %s68
      %p74 = scmp.eq.s32.totalorder %s17, 0
      %p75 = por %p73, %p74
      %p76 = scmp.ne.s32.totalorder %s65, %s68
      %p77 = scmp.eq.s32.totalorder %s22, 7
      %p78 = por %p76, %p77
      %p79 = scmp.ne.s32.totalorder %s68, %s69
      %p80 = scmp.eq.s32.totalorder %s22, 0
      %p81 = por %p79, %p80
      %p82 = scmp.ne.s32.totalorder %s68, %s69
      %p83 = scmp.eq.s32.totalorder %s23, 7
      %p84 = por %p82, %p83
      %p86 = scmp.ne.s32.totalorder %s69, %s85
      %p87 = scmp.eq.s32.totalorder %s23, 0
      %p88 = por %p86, %p87
      %s89 = ssub.s32 %s24, %s36
      %s90 = ssub.s32 %s25, %s32
      %s91 = sor.u32 %s89, %s90
      %p92 = scmp.eq.s32.totalorder %s91, 0
      %s94 = sadd.s32 %s93, 1
      %s95 = scalar_select %p92, %s93, %s94
      %p98 = pneg %p92
      %p99 = scmp.eq.s32.totalorder %s17, 7
      %p100 = por %p98, %p99
      %p101 = scmp.ne.s32.totalorder %s93, %s96
      %p102 = scmp.eq.s32.totalorder %s17, 0
      %p103 = por %p101, %p102
      %p104 = scmp.ne.s32.totalorder %s93, %s96
      %p105 = scmp.eq.s32.totalorder %s22, 7
      %p106 = por %p104, %p105
      %p107 = scmp.ne.s32.totalorder %s96, %s97
      %p108 = scmp.eq.s32.totalorder %s22, 0
      %p109 = por %p107, %p108
      %p110 = scmp.ne.s32.totalorder %s96, %s97
      %p111 = scmp.eq.s32.totalorder %s23, 7
      %p112 = por %p110, %p111
      %p114 = scmp.ne.s32.totalorder %s97, %s113
      %p115 = scmp.eq.s32.totalorder %s23, 0
      %p116 = por %p114, %p115
      %p117 = scmp.le.s32.totalorder 1, %s17
      %p118 = scmp.lt.s32.totalorder %s17, 9
      %p119 = pnand %p117, %p118
      %p120 = pneg %p119
      // Predicated region
      $region9: #{tpu_custom_call.1} parent=5 // pred_check
        _
      $region10: #{tpu_custom_call.1} parent=5 // pred_check_branch
        %122 = sbr.rel (%p119) target = $region12
      $region11: #{tpu_custom_call.1} parent=5 // pred_region
        %s123 = ssub.s32 %s17, 1
      $region12: #{tpu_custom_call.1} parent=5 // pred_fallthru
        _
      %p124 = scmp.lt.s32.totalorder %s17, 8
      // Predicated region
      $region13: #{tpu_custom_call.1} parent=5 // pred_check
        %p125 = pneg %p124
      $region14: #{tpu_custom_call.1} parent=5 // pred_check_branch
        %127 = sbr.rel (%p125) target = $region16
      $region15: #{tpu_custom_call.1} parent=5 // pred_region
        // Predicated region
        $region17: #{tpu_custom_call.1} parent=15 // pred_check
          %p128 = pneg %p49
        $region18: #{tpu_custom_call.1} parent=15 // pred_check_branch
          %130 = sbr.rel (%p128) target = $region20
        $region19: #{tpu_custom_call.1} parent=15 // pred_region
          %s131 = sand.u32 %s39, 1
          %s132 = scalar_lea.sflag [#allocation3], %s131
          %s133 = sand.u32 %s39, 1
          %s134 = smul.addr %s133, 128
          %s135 = scalar_lea.vmem [#allocation2], %s134
          %s136 = smul.u32 32, %s24
          %138 = vsyncadd %s132, 0
          %s139 = smul.addr %s136, 4
          %s140 = scalar_lea.hbm %s0, %s139
          %s141 = sshll.u32 %s140, 4
          %s142 = int_to_ptr.hbm [resolvable:$true] %s141
          %s143 = sshll.u32 %s135, 4
          %s144 = int_to_ptr.vmem [resolvable:$true] %s143
          %149 = dma.hbm_to_vmem [thread:$0]  %s142, 2048, %s144, %s132, 64, 64, 4
        $region20: #{tpu_custom_call.1} parent=15 // pred_fallthru
          _
        // Predicated region
        $region21: #{tpu_custom_call.1} parent=15 // pred_check
          %p150 = pneg %p75
        $region22: #{tpu_custom_call.1} parent=15 // pred_check_branch
          %152 = sbr.rel (%p150) target = $region24
        $region23: #{tpu_custom_call.1} parent=15 // pred_region
          %s153 = sand.u32 %s65, 1
          %s154 = scalar_lea.sflag [#allocation6], %s153
          %s155 = sand.u32 %s65, 1
          %s156 = smul.addr %s155, 64
          %s157 = scalar_lea.vmem [#allocation5], %s156
          %159 = vsyncadd %s154, 0
          %s160 = smul.addr %s25, 4
          %s161 = scalar_lea.hbm %s1, %s160
          %s162 = sshll.u32 %s161, 4
          %s163 = int_to_ptr.hbm [resolvable:$true] %s162
          %s164 = sshll.u32 %s157, 4
          %s165 = int_to_ptr.vmem [resolvable:$true] %s164
          %170 = dma.hbm_to_vmem [thread:$0]  %s163, 1024, %s165, %s154, 128, 64, 4
        $region24: #{tpu_custom_call.1} parent=15 // pred_fallthru
          _
      $region16: #{tpu_custom_call.1} parent=5 // pred_fallthru
        _
      %p171 = scmp.le.s32.totalorder 1, %s17
      %p172 = scmp.lt.s32.totalorder %s17, 9
      %p173 = pnand %p171, %p172
      %p174 = pneg %p173
      // Predicated region
      $region25: #{tpu_custom_call.1} parent=5 // pred_check
        _
      $region26: #{tpu_custom_call.1} parent=5 // pred_check_branch
        %176 = sbr.rel (%p173) target = $region28
      $region27: #{tpu_custom_call.1} parent=5 // pred_region
        %s177 = ssub.s32 %s17, 1
        %s178 = sand.u32 %s42, 1
        %s179 = scalar_lea.sflag [#allocation3], %s178
        %s180 = sand.u32 %s42, 1
        %s181 = smul.addr %s180, 128
        %s182 = scalar_lea.vmem [#allocation2], %s181
        // Predicated region
        $region29: #{tpu_custom_call.1} parent=27 // pred_check
          %p183 = pneg %p55
        $region30: #{tpu_custom_call.1} parent=27 // pred_check_branch
          %185 = sbr.rel (%p183) target = $region32
        $region31: #{tpu_custom_call.1} parent=27 // pred_region
          %187 = dma.done %s179, 2048
        $region32: #{tpu_custom_call.1} parent=27 // pred_fallthru
          _
        %s188 = sand.u32 %s68, 1
        %s189 = scalar_lea.sflag [#allocation6], %s188
        %s190 = sand.u32 %s68, 1
        %s191 = smul.addr %s190, 64
        %s192 = scalar_lea.vmem [#allocation5], %s191
        // Predicated region
        $region33: #{tpu_custom_call.1} parent=27 // pred_check
          %p193 = pneg %p81
        $region34: #{tpu_custom_call.1} parent=27 // pred_check_branch
          %195 = sbr.rel (%p193) target = $region36
        $region35: #{tpu_custom_call.1} parent=27 // pred_region
          %197 = dma.done %s189, 1024
        $region36: #{tpu_custom_call.1} parent=27 // pred_fallthru
          _
        %s198 = sand.u32 %s42, 1
        %s199 = scalar_lea.sflag [#allocation3], %s198
        %s200 = sand.u32 %s42, 1
        %s201 = smul.addr %s200, 128
        %s202 = scalar_lea.vmem [#allocation2], %s201
        %p203 = pneg %p55
        %p204 = pneg %p52
        %s205 = sand.u32 %s68, 1
        %s206 = scalar_lea.sflag [#allocation6], %s205
        %s207 = sand.u32 %s68, 1
        %s208 = smul.addr %s207, 64
        %s209 = scalar_lea.vmem [#allocation5], %s208
        %p210 = pneg %p81
        %p211 = pneg %p78
        %p212 = pneg %p109
        %p213 = pneg %p106
        %s214 = sand.u32 %s96, 1
        %s215 = scalar_lea.sflag [#allocation4], %s214
        %s216 = sand.u32 %s96, 1
        %s217 = smul.addr %s216, 128
        %s218 = scalar_lea.vmem [#allocation7], %s217
        %s219 = smul.u32 32, %s26
        %s220 = smul.u32 32, %s26
        %v221 = vld [vmem:[%s182] sm:$0xf]
        %v222 = vld [vmem:[%s182 + $0x4] sm:$0xf]
        %v223 = vld [vmem:[%s182 + $0x8] sm:$0xf]
        %v224 = vld [vmem:[%s182 + $0xc] sm:$0xf]
        %v225 = vld [vmem:[%s182 + $0x10] sm:$0xf]
        %v226 = vld [vmem:[%s182 + $0x14] sm:$0xf]
        %v227 = vld [vmem:[%s182 + $0x18] sm:$0xf]
        %v228 = vld [vmem:[%s182 + $0x1c] sm:$0xf]
        %v229 = vld [vmem:[%s182 + $0x20] sm:$0xf]
        %v230 = vld [vmem:[%s182 + $0x24] sm:$0xf]
        %v231 = vld [vmem:[%s182 + $0x28] sm:$0xf]
        %v232 = vld [vmem:[%s182 + $0x2c] sm:$0xf]
        %v233 = vld [vmem:[%s182 + $0x30] sm:$0xf]
        %v234 = vld [vmem:[%s182 + $0x34] sm:$0xf]
        %v235 = vld [vmem:[%s182 + $0x38] sm:$0xf]
        %v236 = vld [vmem:[%s182 + $0x3c] sm:$0xf]
        %v237 = vld [vmem:[%s182 + $0x40] sm:$0xf]
        %v238 = vld [vmem:[%s182 + $0x44] sm:$0xf]
        %v239 = vld [vmem:[%s182 + $0x48] sm:$0xf]
        %v240 = vld [vmem:[%s182 + $0x4c] sm:$0xf]
        %v241 = vld [vmem:[%s182 + $0x50] sm:$0xf]
        %v242 = vld [vmem:[%s182 + $0x54] sm:$0xf]
        %v243 = vld [vmem:[%s182 + $0x58] sm:$0xf]
        %v244 = vld [vmem:[%s182 + $0x5c] sm:$0xf]
        %v245 = vld [vmem:[%s182 + $0x60] sm:$0xf]
        %v246 = vld [vmem:[%s182 + $0x64] sm:$0xf]
        %v247 = vld [vmem:[%s182 + $0x68] sm:$0xf]
        %v248 = vld [vmem:[%s182 + $0x6c] sm:$0xf]
        %v249 = vld [vmem:[%s182 + $0x70] sm:$0xf]
        %v250 = vld [vmem:[%s182 + $0x74] sm:$0xf]
        %v251 = vld [vmem:[%s182 + $0x78] sm:$0xf]
        %v252 = vld [vmem:[%s182 + $0x7c] sm:$0xf]
        %v253 = vld [vmem:[%s192] sm:$0xf]
        %v254 = vld [vmem:[%s192 + $0x4] sm:$0xf]
        %v255 = vld [vmem:[%s192 + $0x8] sm:$0xf]
        %v256 = vld [vmem:[%s192 + $0xc] sm:$0xf]
        %v257 = vld [vmem:[%s192 + $0x10] sm:$0xf]
        %v258 = vld [vmem:[%s192 + $0x14] sm:$0xf]
        %v259 = vld [vmem:[%s192 + $0x18] sm:$0xf]
        %v260 = vld [vmem:[%s192 + $0x1c] sm:$0xf]
        %v261 = vld [vmem:[%s192 + $0x20] sm:$0xf]
        %v262 = vld [vmem:[%s192 + $0x24] sm:$0xf]
        %v263 = vld [vmem:[%s192 + $0x28] sm:$0xf]
        %v264 = vld [vmem:[%s192 + $0x2c] sm:$0xf]
        %v265 = vld [vmem:[%s192 + $0x30] sm:$0xf]
        %v266 = vld [vmem:[%s192 + $0x34] sm:$0xf]
        %v267 = vld [vmem:[%s192 + $0x38] sm:$0xf]
        %v268 = vld [vmem:[%s192 + $0x3c] sm:$0xf]
        %v301 = vunpack.c.l.b16 %v221
        %v302 = vunpack.c.l.b16 %v222
        %v303 = vunpack.c.l.b16 %v223
        %v304 = vunpack.c.l.b16 %v224
        %v305 = vunpack.c.l.b16 %v225
        %v306 = vunpack.c.l.b16 %v226
        %v307 = vunpack.c.l.b16 %v227
        %v308 = vunpack.c.l.b16 %v228
        %v309 = vunpack.c.l.b16 %v229
        %v310 = vunpack.c.l.b16 %v230
        %v311 = vunpack.c.l.b16 %v231
        %v312 = vunpack.c.l.b16 %v232
        %v313 = vunpack.c.l.b16 %v233
        %v314 = vunpack.c.l.b16 %v234
        %v315 = vunpack.c.l.b16 %v235
        %v316 = vunpack.c.l.b16 %v236
        %v317 = vunpack.c.l.b16 %v237
        %v318 = vunpack.c.l.b16 %v238
        %v319 = vunpack.c.l.b16 %v239
        %v320 = vunpack.c.l.b16 %v240
        %v321 = vunpack.c.l.b16 %v241
        %v322 = vunpack.c.l.b16 %v242
        %v323 = vunpack.c.l.b16 %v243
        %v324 = vunpack.c.l.b16 %v244
        %v325 = vunpack.c.l.b16 %v245
        %v326 = vunpack.c.l.b16 %v246
        %v327 = vunpack.c.l.b16 %v247
        %v328 = vunpack.c.l.b16 %v248
        %v329 = vunpack.c.l.b16 %v249
        %v330 = vunpack.c.l.b16 %v250
        %v331 = vunpack.c.l.b16 %v251
        %v332 = vunpack.c.l.b16 %v252
        %v333 = vpack.c.b16 %v302, %v301
        %v334 = vpack.c.b16 %v304, %v303
        %v335 = vpack.c.b16 %v306, %v305
        %v336 = vpack.c.b16 %v308, %v307
        %v337 = vpack.c.b16 %v310, %v309
        %v338 = vpack.c.b16 %v312, %v311
        %v339 = vpack.c.b16 %v314, %v313
        %v340 = vpack.c.b16 %v316, %v315
        %v341 = vpack.c.b16 %v318, %v317
        %v342 = vpack.c.b16 %v320, %v319
        %v343 = vpack.c.b16 %v322, %v321
        %v344 = vpack.c.b16 %v324, %v323
        %v345 = vpack.c.b16 %v326, %v325
        %v346 = vpack.c.b16 %v328, %v327
        %v347 = vpack.c.b16 %v330, %v329
        %v348 = vpack.c.b16 %v332, %v331
        %v381 = vunpack.c.l.b16 %v253
        %v382 = vunpack.c.l.b16 %v254
        %v383 = vunpack.c.l.b16 %v255
        %v384 = vunpack.c.l.b16 %v256
        %v385 = vunpack.c.l.b16 %v257
        %v386 = vunpack.c.l.b16 %v258
        %v387 = vunpack.c.l.b16 %v259
        %v388 = vunpack.c.l.b16 %v260
        %v389 = vunpack.c.l.b16 %v261
        %v390 = vunpack.c.l.b16 %v262
        %v391 = vunpack.c.l.b16 %v263
        %v392 = vunpack.c.l.b16 %v264
        %v393 = vunpack.c.l.b16 %v265
        %v394 = vunpack.c.l.b16 %v266
        %v395 = vunpack.c.l.b16 %v267
        %v396 = vunpack.c.l.b16 %v268
        %v397 = vpack.c.b16 %v382, %v381
        %v398 = vpack.c.b16 %v384, %v383
        %v399 = vpack.c.b16 %v386, %v385
        %v400 = vpack.c.b16 %v388, %v387
        %v401 = vpack.c.b16 %v390, %v389
        %v402 = vpack.c.b16 %v392, %v391
        %v403 = vpack.c.b16 %v394, %v393
        %v404 = vpack.c.b16 %v396, %v395
        %413 = vmatpush.bf16.msra.mxu0 %v404
        %414 = vmatpush.bf16.msra.mxu0 %v403
        %415 = vmatpush.bf16.msra.mxu0 %v402
        %416 = vmatpush.bf16.msra.mxu0 %v401
        %417 = vmatpush.bf16.msra.mxu0 %v400
        %418 = vmatpush.bf16.msra.mxu0 %v399
        %419 = vmatpush.bf16.msra.mxu0 %v398
        %420 = vmatpush.bf16.msra.mxu0 %v397
        %421 = vmatmul.bf16.gmra.mxu0 %v333
        %v422 = vpop.f32.mrf.mxu0
        %v423 = vadd.f32 0.0, %v422
        %v424 = vpop.f32.mrf.mxu0
        %v425 = vadd.f32 0.0, %v424
        %426 = vmatmul.bf16.gmra.mxu0 %v334
        %v427 = vpop.f32.mrf.mxu0
        %v428 = vadd.f32 0.0, %v427
        %v429 = vpop.f32.mrf.mxu0
        %v430 = vadd.f32 0.0, %v429
        %431 = vmatmul.bf16.gmra.mxu0 %v335
        %v432 = vpop.f32.mrf.mxu0
        %v433 = vadd.f32 0.0, %v432
        %v434 = vpop.f32.mrf.mxu0
        %v435 = vadd.f32 0.0, %v434
        %436 = vmatmul.bf16.gmra.mxu0 %v336
        %v437 = vpop.f32.mrf.mxu0
        %v438 = vadd.f32 0.0, %v437
        %v439 = vpop.f32.mrf.mxu0
        %v440 = vadd.f32 0.0, %v439
        %441 = vmatmul.bf16.gmra.mxu0 %v337
        %v442 = vpop.f32.mrf.mxu0
        %v443 = vadd.f32 0.0, %v442
        %v444 = vpop.f32.mrf.mxu0
        %v445 = vadd.f32 0.0, %v444
        %446 = vmatmul.bf16.gmra.mxu0 %v338
        %v447 = vpop.f32.mrf.mxu0
        %v448 = vadd.f32 0.0, %v447
        %v449 = vpop.f32.mrf.mxu0
        %v450 = vadd.f32 0.0, %v449
        %451 = vmatmul.bf16.gmra.mxu0 %v339
        %v452 = vpop.f32.mrf.mxu0
        %v453 = vadd.f32 0.0, %v452
        %v454 = vpop.f32.mrf.mxu0
        %v455 = vadd.f32 0.0, %v454
        %456 = vmatmul.bf16.gmra.mxu0 %v340
        %v457 = vpop.f32.mrf.mxu0
        %v458 = vadd.f32 0.0, %v457
        %v459 = vpop.f32.mrf.mxu0
        %v460 = vadd.f32 0.0, %v459
        %461 = vmatmul.bf16.gmra.mxu0 %v341
        %v462 = vpop.f32.mrf.mxu0
        %v463 = vadd.f32 0.0, %v462
        %v464 = vpop.f32.mrf.mxu0
        %v465 = vadd.f32 0.0, %v464
        %466 = vmatmul.bf16.gmra.mxu0 %v342
        %v467 = vpop.f32.mrf.mxu0
        %v468 = vadd.f32 0.0, %v467
        %v469 = vpop.f32.mrf.mxu0
        %v470 = vadd.f32 0.0, %v469
        %471 = vmatmul.bf16.gmra.mxu0 %v343
        %v472 = vpop.f32.mrf.mxu0
        %v473 = vadd.f32 0.0, %v472
        %v474 = vpop.f32.mrf.mxu0
        %v475 = vadd.f32 0.0, %v474
        %476 = vmatmul.bf16.gmra.mxu0 %v344
        %v477 = vpop.f32.mrf.mxu0
        %v478 = vadd.f32 0.0, %v477
        %v479 = vpop.f32.mrf.mxu0
        %v480 = vadd.f32 0.0, %v479
        %481 = vmatmul.bf16.gmra.mxu0 %v345
        %v482 = vpop.f32.mrf.mxu0
        %v483 = vadd.f32 0.0, %v482
        %v484 = vpop.f32.mrf.mxu0
        %v485 = vadd.f32 0.0, %v484
        %486 = vmatmul.bf16.gmra.mxu0 %v346
        %v487 = vpop.f32.mrf.mxu0
        %v488 = vadd.f32 0.0, %v487
        %v489 = vpop.f32.mrf.mxu0
        %v490 = vadd.f32 0.0, %v489
        %491 = vmatmul.bf16.gmra.mxu0 %v347
        %v492 = vpop.f32.mrf.mxu0
        %v493 = vadd.f32 0.0, %v492
        %v494 = vpop.f32.mrf.mxu0
        %v495 = vadd.f32 0.0, %v494
        %496 = vmatmul.bf16.gmra.mxu0 %v348
        %v497 = vpop.f32.mrf.mxu0
        %v498 = vadd.f32 0.0, %v497
        %v499 = vpop.f32.mrf.mxu0
        %v500 = vadd.f32 0.0, %v499
        %501 = vdwg.mxu0
        %v502 = vpack.c.bf16 %v423, %v423
        %v503 = vpack.c.bf16 %v425, %v425
        %v504 = vpack.c.bf16 %v428, %v428
        %v505 = vpack.c.bf16 %v430, %v430
        %v506 = vpack.c.bf16 %v433, %v433
        %v507 = vpack.c.bf16 %v435, %v435
        %v508 = vpack.c.bf16 %v438, %v438
        %v509 = vpack.c.bf16 %v440, %v440
        %v510 = vpack.c.bf16 %v443, %v443
        %v511 = vpack.c.bf16 %v445, %v445
        %v512 = vpack.c.bf16 %v448, %v448
        %v513 = vpack.c.bf16 %v450, %v450
        %v514 = vpack.c.bf16 %v453, %v453
        %v515 = vpack.c.bf16 %v455, %v455
        %v516 = vpack.c.bf16 %v458, %v458
        %v517 = vpack.c.bf16 %v460, %v460
        %v518 = vpack.c.bf16 %v463, %v463
        %v519 = vpack.c.bf16 %v465, %v465
        %v520 = vpack.c.bf16 %v468, %v468
        %v521 = vpack.c.bf16 %v470, %v470
        %v522 = vpack.c.bf16 %v473, %v473
        %v523 = vpack.c.bf16 %v475, %v475
        %v524 = vpack.c.bf16 %v478, %v478
        %v525 = vpack.c.bf16 %v480, %v480
        %v526 = vpack.c.bf16 %v483, %v483
        %v527 = vpack.c.bf16 %v485, %v485
        %v528 = vpack.c.bf16 %v488, %v488
        %v529 = vpack.c.bf16 %v490, %v490
        %v530 = vpack.c.bf16 %v493, %v493
        %v531 = vpack.c.bf16 %v495, %v495
        %v532 = vpack.c.bf16 %v498, %v498
        %v533 = vpack.c.bf16 %v500, %v500
        %534 = vst [vmem:[%s218] sm:$0xf] %v502
        %535 = vst [vmem:[%s218 + $0x4] sm:$0xf] %v503
        %536 = vst [vmem:[%s218 + $0x8] sm:$0xf] %v504
        %537 = vst [vmem:[%s218 + $0xc] sm:$0xf] %v505
        %538 = vst [vmem:[%s218 + $0x10] sm:$0xf] %v506
        %539 = vst [vmem:[%s218 + $0x14] sm:$0xf] %v507
        %540 = vst [vmem:[%s218 + $0x18] sm:$0xf] %v508
        %541 = vst [vmem:[%s218 + $0x1c] sm:$0xf] %v509
        %542 = vst [vmem:[%s218 + $0x20] sm:$0xf] %v510
        %543 = vst [vmem:[%s218 + $0x24] sm:$0xf] %v511
        %544 = vst [vmem:[%s218 + $0x28] sm:$0xf] %v512
        %545 = vst [vmem:[%s218 + $0x2c] sm:$0xf] %v513
        %546 = vst [vmem:[%s218 + $0x30] sm:$0xf] %v514
        %547 = vst [vmem:[%s218 + $0x34] sm:$0xf] %v515
        %548 = vst [vmem:[%s218 + $0x38] sm:$0xf] %v516
        %549 = vst [vmem:[%s218 + $0x3c] sm:$0xf] %v517
        %550 = vst [vmem:[%s218 + $0x40] sm:$0xf] %v518
        %551 = vst [vmem:[%s218 + $0x44] sm:$0xf] %v519
        %552 = vst [vmem:[%s218 + $0x48] sm:$0xf] %v520
        %553 = vst [vmem:[%s218 + $0x4c] sm:$0xf] %v521
        %554 = vst [vmem:[%s218 + $0x50] sm:$0xf] %v522
        %555 = vst [vmem:[%s218 + $0x54] sm:$0xf] %v523
        %556 = vst [vmem:[%s218 + $0x58] sm:$0xf] %v524
        %557 = vst [vmem:[%s218 + $0x5c] sm:$0xf] %v525
        %558 = vst [vmem:[%s218 + $0x60] sm:$0xf] %v526
        %559 = vst [vmem:[%s218 + $0x64] sm:$0xf] %v527
        %560 = vst [vmem:[%s218 + $0x68] sm:$0xf] %v528
        %561 = vst [vmem:[%s218 + $0x6c] sm:$0xf] %v529
        %562 = vst [vmem:[%s218 + $0x70] sm:$0xf] %v530
        %563 = vst [vmem:[%s218 + $0x74] sm:$0xf] %v531
        %564 = vst [vmem:[%s218 + $0x78] sm:$0xf] %v532
        %565 = vst [vmem:[%s218 + $0x7c] sm:$0xf] %v533
        %s566 = sand.u32 %s96, 1
        %s567 = scalar_lea.sflag [#allocation4], %s566
        %s568 = sand.u32 %s96, 1
        %s569 = smul.addr %s568, 128
        %s570 = scalar_lea.vmem [#allocation7], %s569
        // Predicated region
        $region37: #{tpu_custom_call.1} parent=27 // pred_check
          %p571 = pneg %p106
        $region38: #{tpu_custom_call.1} parent=27 // pred_check_branch
          %573 = sbr.rel (%p571) target = $region40
        $region39: #{tpu_custom_call.1} parent=27 // pred_region
          %s574 = smul.u32 32, %s26
          %576 = vsyncadd %s567, 0
          %s577 = smul.addr %s574, 2
          %s578 = sadd.s32 %s27, %s577
          %s579 = smul.addr %s578, 4
          %s580 = scalar_lea.hbm %s2, %s579
          %s581 = sshll.u32 %s570, 4
          %s582 = int_to_ptr.vmem [resolvable:$true] %s581
          %s583 = sshll.u32 %s580, 4
          %s584 = int_to_ptr.hbm [resolvable:$true] %s583
          %589 = dma.vmem_to_hbm [thread:$0]  %s582, 2048, %s584, %s567, 64, 128, 4
        $region40: #{tpu_custom_call.1} parent=27 // pred_fallthru
          _
      $region28: #{tpu_custom_call.1} parent=5 // pred_fallthru
        _
      %p590 = scmp.le.s32.totalorder 2, %s17
      // Predicated region
      $region41: #{tpu_custom_call.1} parent=5 // pred_check
        %p591 = pneg %p590
      $region42: #{tpu_custom_call.1} parent=5 // pred_check_branch
        %593 = sbr.rel (%p591) target = $region44
      $region43: #{tpu_custom_call.1} parent=5 // pred_region
        %s594 = ssub.s32 %s17, 2
        // Predicated region
        $region45: #{tpu_custom_call.1} parent=43 // pred_check
          %p595 = pneg %p112
        $region46: #{tpu_custom_call.1} parent=43 // pred_check_branch
          %597 = sbr.rel (%p595) target = $region48
        $region47: #{tpu_custom_call.1} parent=43 // pred_region
          %s598 = sand.u32 %s97, 1
          %s599 = scalar_lea.sflag [#allocation4], %s598
          %s600 = sand.u32 %s97, 1
          %s601 = smul.addr %s600, 128
          %s602 = scalar_lea.vmem [#allocation7], %s601
          %604 = dma.done %s599, 2048
        $region48: #{tpu_custom_call.1} parent=43 // pred_fallthru
          _
      $region44: #{tpu_custom_call.1} parent=5 // pred_fallthru
        _
    $region6: #{tpu_custom_call.1} parent=1 // loop_footer
      %s21 = sadd.s32 1, %s17
    $region7: #{tpu_custom_call.1} parent=1 // loop_footer_branch
      %16 = sbr.rel target = $region3
    $region8: #{tpu_custom_call.1} parent=1 // loop_exit
      _
    %605 = vsyncpa [#allocation3], 1
    %s606 = scalar_lea.sflag [#allocation3], 1
    %607 = vsyncpa %s606, 1
    %608 = vsyncpa [#allocation6], 1
    %s609 = scalar_lea.sflag [#allocation6], 1
    %610 = vsyncpa %s609, 1
    %611 = vsyncpa [#allocation4], 1
    %s612 = scalar_lea.sflag [#allocation4], 1
    %613 = vsyncpa %s612, 1

</llo_original>
